<compile_context>
chip_gen: v7x
topology: tpu7x:2x2x1
jax: 0.10.0
libtpu: 0.0.40
codegen_flags: <defaults>
</compile_context>

<pallas_src>
import functools

import jax
import jax.numpy as jnp
import numpy as np
from jax.experimental import pallas as pl
from jax.experimental.pallas import tpu as pltpu


def _round_up(x: int, m: int) -> int:
    return ((x + m - 1) // m) * m


def _vmem_budget_bytes() -> int:
    """Per-generation scoped-VMEM budget: ~40 MiB (v7x), ~80 MiB (v5e/v6e)."""
    try:
        cap = int(pltpu.get_tpu_info().vmem_capacity_bytes)
    except Exception:  # pragma: no cover - conservative fallback
        cap = 64 << 20
    return max(32 << 20, min((cap * 5) // 8, 96 << 20))


def _adaptive_pool_matrix(L: int, T: int, T_pad: int, dtype) -> jnp.ndarray:
    """Exact (L, T_pad) matrix reproducing F.adaptive_avg_pool1d.

    Columns [T, T_pad) are zero padding so the kernel output is lane-dense."""
    i = np.arange(T, dtype=np.int64)
    starts = (i * L) // T
    ends = ((i + 1) * L + T - 1) // T
    j = np.arange(L, dtype=np.int64)
    mask = (j[:, None] >= starts[None, :]) & (j[:, None] < ends[None, :])
    counts = (ends - starts).astype(np.float64)
    w = mask.astype(np.float64) / counts[None, :]
    if T_pad > T:
        w = np.concatenate([w, np.zeros((L, T_pad - T), dtype=np.float64)], 1)
    return jnp.asarray(w, dtype=dtype)


def _window_pool_matrix(tc: int, window: int, dtype) -> jnp.ndarray:
    """(tc*window, tc) block-diagonal ones/window matrix (per-column-tile)."""
    w = np.repeat(np.eye(tc, dtype=np.float64), window, axis=0) / float(window)
    return jnp.asarray(w, dtype=dtype)


def _window_pool_kernel(x_ref, w_ref, o_ref):
    # (tm, tc*window) @ (tc*window, tc) on the MXU (idle otherwise in this
    # memory-bound kernel); avoids lane-splitting reshapes / XLU reductions.
    o_ref[...] = jnp.dot(
        x_ref[...], w_ref[...], preferred_element_type=jnp.float32
    ).astype(o_ref.dtype)


def _matmul_pool_kernel(x_ref, w_ref, o_ref, acc_ref):
    # K-tiled (tm, tk) @ (tk, T_pad) with f32 accumulator; K axis is last.
    @pl.when(pl.program_id(1) == 0)
    def _():
        acc_ref[...] = jnp.zeros_like(acc_ref)

    acc_ref[...] += jnp.dot(
        x_ref[...], w_ref[...], preferred_element_type=jnp.float32
    )

    @pl.when(pl.program_id(1) == pl.num_programs(1) - 1)
    def _():
        o_ref[...] = acc_ref[...].astype(o_ref.dtype)


def aggregator_forward(features: jnp.ndarray, target_dim: int) -> jnp.ndarray:
    """Pallas equivalent of Aggregator(target_dim).forward(features)."""
    n = features.shape[0]
    x = features.reshape(n, -1)  # (N, L)
    L = x.shape[1]
    T = int(target_dim)
    out_dtype = x.dtype
    xb = x.dtype.itemsize
    w_dtype = jnp.float32 if xb >= 4 else x.dtype
    wb = jnp.dtype(w_dtype).itemsize
    min_tm = 8 * max(1, 4 // xb)  # sublane quantum: 8 f32 / 16 bf16 / 32 int8
    budget = _vmem_budget_bytes()

    def pick_tm(cap: int) -> int:
        if n < min_tm:
            return max(n, 1)  # block row dim == full array dim is legal
        return max(min_tm, (min(cap, n) // min_tm) * min_tm)

    if L % T == 0 and T % 128 == 0:
        # --- Path 1: contiguous equal windows, MXU block-diag pooling -------
        window = L // T
        tm = pick_tm(256)
        tc = 128

        def footprint(tm_, tc_):
            return (2 * tm_ * tc_ * window * xb       # X tile (double-buffered)
                    + 2 * tc_ * window * tc_ * wb     # W_blk (constant index)
                    + 2 * tm_ * tc_ * xb)             # output tile

        # Grow the output-column tile toward ~4 MiB input tile per buffer.
        while (T % (tc * 2) == 0
               and tm * (tc * 2) * window * xb <= (4 << 20)
               and footprint(tm, tc * 2) <= budget):
            tc *= 2
        # Grow the row tile toward ~8 MiB input tile while rows remain.
        while (tm * 2 <= n and tm < 1024
               and (tm * 2) * tc * window * xb <= (8 << 20)
               and footprint(tm * 2, tc) <= budget):
            tm *= 2
        # Safety shrink (keep multiples of the sublane quantum).
        while footprint(tm, tc) > budget and tm > min_tm:
            tm = max(min_tm, _round_up(tm // 2, min_tm))

        w_blk = _window_pool_matrix(tc, window, w_dtype)
        grid = (pl.cdiv(n, tm), T // tc)

        out = pl.pallas_call(
            _window_pool_kernel,
            out_shape=jax.ShapeDtypeStruct((n, T), out_dtype),
            grid=grid,
            in_specs=[
                pl.BlockSpec((tm, tc * window), lambda i, j: (i, j)),
                pl.BlockSpec((tc * window, tc), lambda i, j: (0, 0)),
            ],
            out_specs=pl.BlockSpec((tm, tc), lambda i, j: (i, j)),
            compiler_params=pltpu.CompilerParams(
                dimension_semantics=("parallel", "parallel"),
                vmem_limit_bytes=budget,
            ),
            cost_estimate=pl.CostEstimate(
                flops=int(2 * n * L * tc),
                transcendentals=0,
                bytes_accessed=int(n * L * xb + n * T * xb),
            ),
        )(x, w_blk)
        return out

    # --- Path 2: general adaptive pooling as a K-tiled matmul ----------------
    T_pad = _round_up(T, 128)
    tm = pick_tm(256)

    def footprint(tm_, tk_):
        return (2 * tm_ * tk_ * xb            # X tile
                + 2 * tk_ * T_pad * wb        # W tile
                + tm_ * T_pad * 4             # f32 accumulator scratch
                + 2 * tm_ * T_pad * xb)       # output tile

    # K tile: largest multiple of 128 dividing L (<= 4096); fallback tk = L.
    tk_cands = [k for k in range(128, min(L, 4096) + 1, 128) if L % k == 0]
    if not tk_cands:
        tk_cands = [L]
    while len(tk_cands) > 1 and footprint(tm, tk_cands[-1]) > budget:
        tk_cands.pop()
    tk = tk_cands[-1]
    # Grow rows (fewer W re-streams, fuller MXU M dim) while it fits.
    while tm * 2 <= n and tm < 1024 and footprint(tm * 2, tk) <= budget:
        tm *= 2
    while footprint(tm, tk) > budget and tm > min_tm:
        tm = max(min_tm, _round_up(tm // 2, min_tm))

    w = _adaptive_pool_matrix(L, T, T_pad, w_dtype)
    grid = (pl.cdiv(n, tm), pl.cdiv(L, tk))

    out = pl.pallas_call(
        _matmul_pool_kernel,
        out_shape=jax.ShapeDtypeStruct((n, T_pad), out_dtype),
        grid=grid,
        in_specs=[
            pl.BlockSpec((tm, tk), lambda i, k: (i, k)),
            pl.BlockSpec((tk, T_pad), lambda i, k: (k, 0)),
        ],
        out_specs=pl.BlockSpec((tm, T_pad), lambda i, k: (i, 0)),
        scratch_shapes=[pltpu.VMEM((tm, T_pad), jnp.float32)],
        compiler_params=pltpu.CompilerParams(
            dimension_semantics=("parallel", "arbitrary"),
            vmem_limit_bytes=budget,
        ),
        cost_estimate=pl.CostEstimate(
            flops=int(2 * n * L * T_pad),
            transcendentals=0,
            bytes_accessed=int(n * L * xb + L * T_pad * wb + n * T_pad * xb),
        ),
    )(x, w)
    return out[:, :T] if T_pad != T else out


def _reference_forward(features: np.ndarray, target_dim: int) -> np.ndarray:
    """Pure-numpy reference reproducing F.adaptive_avg_pool1d semantics."""
    n = features.shape[0]
    x = features.reshape(n, -1)
    L = x.shape[1]
    out = np.zeros((n, target_dim), dtype=np.float64)
    for i in range(target_dim):
        s = (i * L) // target_dim
        e = ((i + 1) * L + target_dim - 1) // target_dim
        out[:, i] = x[:, s:e].astype(np.float64).mean(axis=1)
    return out.astype(features.dtype)


if __name__ == "__main__":
    # PatchCore Aggregator inputs: (num_patches, num_layers, channels);
    # forward flattens everything past the first axis.
    key = jax.random.PRNGKey(0)

    # Case 1: Path 1 (L % T == 0, T % 128 == 0) with tiny N.
    feats_a = jax.random.normal(key, (2, 2, 512), dtype=jnp.float32)  # L = 1024
    out_a = jax.block_until_ready(aggregator_forward(feats_a, 128))
    ref_a = _reference_forward(np.asarray(feats_a), 128)
    np.testing.assert_allclose(np.asarray(out_a), ref_a, rtol=1e-5, atol=1e-5)
    assert out_a.shape == (2, 128)

    # Case 2: Path 2 (L % T != 0, T padded to 128 lanes) with tiny N.
    out_b = jax.block_until_ready(aggregator_forward(feats_a, 96))
    ref_b = _reference_forward(np.asarray(feats_a), 96)
    np.testing.assert_allclose(np.asarray(out_b), ref_b, rtol=1e-5, atol=1e-5)
    assert out_b.shape == (2, 96)

    # Case 3: ragged row count (N not a multiple of the sublane quantum),
    # exercises implicit last-block padding on both paths (no jnp.pad of X).
    feats_c = jax.random.normal(key, (37, 2, 512), dtype=jnp.float32)
    out_c = jax.block_until_ready(aggregator_forward(feats_c, 256))  # Path 1
    ref_c = _reference_forward(np.asarray(feats_c), 256)
    np.testing.assert_allclose(np.asarray(out_c), ref_c, rtol=1e-5, atol=1e-5)
    out_d = jax.block_until_ready(aggregator_forward(feats_c, 96))   # Path 2
    ref_d = _reference_forward(np.asarray(feats_c), 96)
    np.testing.assert_allclose(np.asarray(out_d), ref_d, rtol=1e-5, atol=1e-5)

    print("KERNEL_OK")
</pallas_src>

<mosaic_0001>
module attributes {stable_mosaic.version = 11 : i64} {
  func.func @_window_pool_kernel(%arg0: i32, %arg1: i32, %arg2: memref<2x1024xf32, #tpu.memory_space<vmem>>, %arg3: memref<1024x128xf32, #tpu.memory_space<vmem>>, %arg4: memref<2x128xf32, #tpu.memory_space<vmem>>) attributes {dimension_semantics = [#tpu.dimension_semantics<parallel>, #tpu.dimension_semantics<parallel>], iteration_bounds = array<i64: 1, 1>, scalar_prefetch = 0 : i64, scratch_operands = 0 : i64, tpu.core_type = #tpu.core_type<tc>, window_params = [{transform_indices = @transform_0, window_bounds = array<i64: 2, 1024>}, {pipeline_mode = #tpu.pipeline_mode<synchronous>, transform_indices = @transform_1, window_bounds = array<i64: 1024, 128>}, {transform_indices = @transform_2, window_bounds = array<i64: 2, 128>}]} {
    %c0 = arith.constant 0 : index
    %c0_0 = arith.constant 0 : index
    %0 = vector.load %arg2[%c0, %c0_0] : memref<2x1024xf32, #tpu.memory_space<vmem>>, vector<2x1024xf32>
    %c0_1 = arith.constant 0 : index
    %c0_2 = arith.constant 0 : index
    %1 = vector.load %arg3[%c0_1, %c0_2] : memref<1024x128xf32, #tpu.memory_space<vmem>>, vector<1024x128xf32>
    %cst = arith.constant dense<0.000000e+00> : vector<2x128xf32>
    %2 = tpu.matmul %0, %1, %cst {dimension_numbers = #tpu.dot_dimension_numbers<[1], [0], [0], [1], [0, 0, 1, 1], [], []>} : vector<2x1024xf32>, vector<1024x128xf32>, vector<2x128xf32> -> vector<2x128xf32>
    %c0_3 = arith.constant 0 : index
    %c0_4 = arith.constant 0 : index
    %3 = vector.load %arg4[%c0_3, %c0_4] : memref<2x128xf32, #tpu.memory_space<vmem>>, vector<2x128xf32>
    tpu.vector_store %arg4[%c0_3, %c0_4], %2 {strides = array<i32>} : memref<2x128xf32, #tpu.memory_space<vmem>>, vector<2x128xf32>,
    return
  }
  func.func @transform_0(%arg0: i32, %arg1: i32) -> (i32, i32) {
    %c0_i32 = arith.constant 0 : i32
    return %arg0, %arg1 : i32, i32
  }
  func.func @transform_1(%arg0: i32, %arg1: i32) -> (i32, i32) {
    %c0_i32 = arith.constant 0 : i32
    %c0_i32_0 = arith.constant 0 : i32
    %c0_i32_1 = arith.constant 0 : i32
    return %c0_i32, %c0_i32_0 : i32, i32
  }
  func.func @transform_2(%arg0: i32, %arg1: i32) -> (i32, i32) {
    %c0_i32 = arith.constant 0 : i32
    return %arg0, %arg1 : i32, i32
  }
}

</mosaic_0001>

<llo_original>
// kernel: tpu_custom_call.1
$region0: #{tpu_custom_call.1}
  #allocation0 [shape = 'u32[]', space=smem, size = 0x4, offset = 0x4, fixed_abs, tag = 'smem constant byte address 0x4 - core index']
  #allocation1 [shape = 'u32[144,128]{1,0:T(1,128)}', space=vmem, size = 0x12000, scoped, tag = 'internal scratch']
  %s0 = inlined_call_operand.hbm [shape: f32[2,1024], index: 0, kind: input, shape index: {}]
  %s1 = inlined_call_operand.hbm [shape: f32[1024,128], index: 1, kind: input, shape index: {}]
  %s2 = inlined_call_operand.hbm [shape: f32[2,128], index: 2, kind: output, shape index: {}]
  %s3 = sld [smem:[#allocation0]]
  $region26: #{tpu_custom_call.1} parent=0
    _
  %s5 = ssub.s32 1, %s3
  %s6 = scalar_select 0, %s5, %s3
  $region1: #{tpu_custom_call.1} parent=0
    #allocation2 [shape = 'u8[8192]{0}', space=vmem, size = 0x2000, scoped, tag = 'input window, operand 0, single buffered']
    #allocation3 [shape = 's32[1]{0}', space=sflag, size = 0x4, scoped, tag = 'scoped memory for tpu_custom_call.1']
    #allocation4 [shape = 's32[1]{0}', space=sflag, size = 0x4, scoped, tag = 'scoped memory for tpu_custom_call.1']
    #allocation5 [shape = 'u8[524288]{0}', space=vmem, size = 0x80000, scoped, tag = 'input window, operand 1, single buffered']
    #allocation6 [shape = 's32[1]{0}', space=sflag, size = 0x4, scoped, tag = 'scoped memory for tpu_custom_call.1']
    #allocation7 [shape = 'u8[1024]{0}', space=vmem, size = 0x400, scoped, tag = 'output window, operand 0, single buffered']
    %7 = vsyncpa [#allocation3], 0
    %8 = vsyncpa [#allocation6], 0
    %9 = vsyncpa [#allocation4], 0
    // Predicated region
    $region2: #{tpu_custom_call.1} parent=1 // pred_check
      _
    $region3: #{tpu_custom_call.1} parent=1 // pred_check_branch
      %11 = sbr.rel (0) target = $region5
    $region4: #{tpu_custom_call.1} parent=1 // pred_region
      %s13 = ssub.s32 256, 256
      %14 = vsyncadd [#allocation3], %s13
      %s16 = sshll.u32 [#allocation2], 4
      %s17 = int_to_ptr.vmem [resolvable:$true] %s16
      %19 = dma.hbm_to_vmem [thread:$0]  %s0, 256, %s17, [#allocation3]
    $region5: #{tpu_custom_call.1} parent=1 // pred_fallthru
      _
    // Predicated region
    $region6: #{tpu_custom_call.1} parent=1 // pred_check
      _
    $region7: #{tpu_custom_call.1} parent=1 // pred_check_branch
      %21 = sbr.rel (0) target = $region9
    $region8: #{tpu_custom_call.1} parent=1 // pred_region
      %s23 = ssub.s32 16384, 16384
      %24 = vsyncadd [#allocation6], %s23
      %s25 = sshll.u32 [#allocation5], 4
      %s26 = int_to_ptr.vmem [resolvable:$true] %s25
      %31 = dma.hbm_to_vmem [thread:$0]  %s1, 16384, %s26, [#allocation6], 128, 128, 8
    $region9: #{tpu_custom_call.1} parent=1 // pred_fallthru
      _
    // Predicated region
    $region10: #{tpu_custom_call.1} parent=1 // pred_check
      _
    $region11: #{tpu_custom_call.1} parent=1 // pred_check_branch
      %33 = sbr.rel (0) target = $region13
    $region12: #{tpu_custom_call.1} parent=1 // pred_region
      %34 = dma.done [#allocation3], 256
    $region13: #{tpu_custom_call.1} parent=1 // pred_fallthru
      _
    // Predicated region
    $region14: #{tpu_custom_call.1} parent=1 // pred_check
      _
    $region15: #{tpu_custom_call.1} parent=1 // pred_check_branch
      %36 = sbr.rel (0) target = $region17
    $region16: #{tpu_custom_call.1} parent=1 // pred_region
      %37 = dma.done [#allocation6], 16384
    $region17: #{tpu_custom_call.1} parent=1 // pred_fallthru
      _
    %v38 = vld [vmem:[#allocation2] sm:$0xff]
    %v39 = vld [vmem:[#allocation2 + $0x8] sm:$0xff]
    %v40 = vld [vmem:[#allocation5] sm:$0xff]
    %v41 = vld [vmem:[#allocation5 + $0x8] sm:$0xff]
    %v42 = vld [vmem:[#allocation5 + $0x10] sm:$0xff]
    %v43 = vld [vmem:[#allocation5 + $0x18] sm:$0xff]
    %v44 = vld [vmem:[#allocation5 + $0x20] sm:$0xff]
    %v45 = vld [vmem:[#allocation5 + $0x28] sm:$0xff]
    %v46 = vld [vmem:[#allocation5 + $0x30] sm:$0xff]
    %v47 = vld [vmem:[#allocation5 + $0x38] sm:$0xff]
    %v48 = vld [vmem:[#allocation5 + $0x40] sm:$0xff]
    %v49 = vld [vmem:[#allocation5 + $0x48] sm:$0xff]
    %v50 = vld [vmem:[#allocation5 + $0x50] sm:$0xff]
    %v51 = vld [vmem:[#allocation5 + $0x58] sm:$0xff]
    %v52 = vld [vmem:[#allocation5 + $0x60] sm:$0xff]
    %v53 = vld [vmem:[#allocation5 + $0x68] sm:$0xff]
    %v54 = vld [vmem:[#allocation5 + $0x70] sm:$0xff]
    %v55 = vld [vmem:[#allocation5 + $0x78] sm:$0xff]
    %v56 = vld [vmem:[#allocation5 + $0x80] sm:$0xff]
    %v57 = vld [vmem:[#allocation5 + $0x88] sm:$0xff]
    %v58 = vld [vmem:[#allocation5 + $0x90] sm:$0xff]
    %v59 = vld [vmem:[#allocation5 + $0x98] sm:$0xff]
    %v60 = vld [vmem:[#allocation5 + $0xa0] sm:$0xff]
    %v61 = vld [vmem:[#allocation5 + $0xa8] sm:$0xff]
    %v62 = vld [vmem:[#allocation5 + $0xb0] sm:$0xff]
    %v63 = vld [vmem:[#allocation5 + $0xb8] sm:$0xff]
    %v64 = vld [vmem:[#allocation5 + $0xc0] sm:$0xff]
    %v65 = vld [vmem:[#allocation5 + $0xc8] sm:$0xff]
    %v66 = vld [vmem:[#allocation5 + $0xd0] sm:$0xff]
    %v67 = vld [vmem:[#allocation5 + $0xd8] sm:$0xff]
    %v68 = vld [vmem:[#allocation5 + $0xe0] sm:$0xff]
    %v69 = vld [vmem:[#allocation5 + $0xe8] sm:$0xff]
    %v70 = vld [vmem:[#allocation5 + $0xf0] sm:$0xff]
    %v71 = vld [vmem:[#allocation5 + $0xf8] sm:$0xff]
    %v72 = vld [vmem:[#allocation5 + $0x100] sm:$0xff]
    %v73 = vld [vmem:[#allocation5 + $0x108] sm:$0xff]
    %v74 = vld [vmem:[#allocation5 + $0x110] sm:$0xff]
    %v75 = vld [vmem:[#allocation5 + $0x118] sm:$0xff]
    %v76 = vld [vmem:[#allocation5 + $0x120] sm:$0xff]
    %v77 = vld [vmem:[#allocation5 + $0x128] sm:$0xff]
    %v78 = vld [vmem:[#allocation5 + $0x130] sm:$0xff]
    %v79 = vld [vmem:[#allocation5 + $0x138] sm:$0xff]
    %v80 = vld [vmem:[#allocation5 + $0x140] sm:$0xff]
    %v81 = vld [vmem:[#allocation5 + $0x148] sm:$0xff]
    %v82 = vld [vmem:[#allocation5 + $0x150] sm:$0xff]
    %v83 = vld [vmem:[#allocation5 + $0x158] sm:$0xff]
    %v84 = vld [vmem:[#allocation5 + $0x160] sm:$0xff]
    %v85 = vld [vmem:[#allocation5 + $0x168] sm:$0xff]
    %v86 = vld [vmem:[#allocation5 + $0x170] sm:$0xff]
    %v87 = vld [vmem:[#allocation5 + $0x178] sm:$0xff]
    %v88 = vld [vmem:[#allocation5 + $0x180] sm:$0xff]
    %v89 = vld [vmem:[#allocation5 + $0x188] sm:$0xff]
    %v90 = vld [vmem:[#allocation5 + $0x190] sm:$0xff]
    %v91 = vld [vmem:[#allocation5 + $0x198] sm:$0xff]
    %v92 = vld [vmem:[#allocation5 + $0x1a0] sm:$0xff]
    %v93 = vld [vmem:[#allocation5 + $0x1a8] sm:$0xff]
    %v94 = vld [vmem:[#allocation5 + $0x1b0] sm:$0xff]
    %v95 = vld [vmem:[#allocation5 + $0x1b8] sm:$0xff]
    %v96 = vld [vmem:[#allocation5 + $0x1c0] sm:$0xff]
    %v97 = vld [vmem:[#allocation5 + $0x1c8] sm:$0xff]
    %v98 = vld [vmem:[#allocation5 + $0x1d0] sm:$0xff]
    %v99 = vld [vmem:[#allocation5 + $0x1d8] sm:$0xff]
    %v100 = vld [vmem:[#allocation5 + $0x1e0] sm:$0xff]
    %v101 = vld [vmem:[#allocation5 + $0x1e8] sm:$0xff]
    %v102 = vld [vmem:[#allocation5 + $0x1f0] sm:$0xff]
    %v103 = vld [vmem:[#allocation5 + $0x1f8] sm:$0xff]
    %v104 = vld [vmem:[#allocation5 + $0x200] sm:$0xff]
    %v105 = vld [vmem:[#allocation5 + $0x208] sm:$0xff]
    %v106 = vld [vmem:[#allocation5 + $0x210] sm:$0xff]
    %v107 = vld [vmem:[#allocation5 + $0x218] sm:$0xff]
    %v108 = vld [vmem:[#allocation5 + $0x220] sm:$0xff]
    %v109 = vld [vmem:[#allocation5 + $0x228] sm:$0xff]
    %v110 = vld [vmem:[#allocation5 + $0x230] sm:$0xff]
    %v111 = vld [vmem:[#allocation5 + $0x238] sm:$0xff]
    %v112 = vld [vmem:[#allocation5 + $0x240] sm:$0xff]
    %v113 = vld [vmem:[#allocation5 + $0x248] sm:$0xff]
    %v114 = vld [vmem:[#allocation5 + $0x250] sm:$0xff]
    %v115 = vld [vmem:[#allocation5 + $0x258] sm:$0xff]
    %v116 = vld [vmem:[#allocation5 + $0x260] sm:$0xff]
    %v117 = vld [vmem:[#allocation5 + $0x268] sm:$0xff]
    %v118 = vld [vmem:[#allocation5 + $0x270] sm:$0xff]
    %v119 = vld [vmem:[#allocation5 + $0x278] sm:$0xff]
    %v120 = vld [vmem:[#allocation5 + $0x280] sm:$0xff]
    %v121 = vld [vmem:[#allocation5 + $0x288] sm:$0xff]
    %v122 = vld [vmem:[#allocation5 + $0x290] sm:$0xff]
    %v123 = vld [vmem:[#allocation5 + $0x298] sm:$0xff]
    %v124 = vld [vmem:[#allocation5 + $0x2a0] sm:$0xff]
    %v125 = vld [vmem:[#allocation5 + $0x2a8] sm:$0xff]
    %v126 = vld [vmem:[#allocation5 + $0x2b0] sm:$0xff]
    %v127 = vld [vmem:[#allocation5 + $0x2b8] sm:$0xff]
    %v128 = vld [vmem:[#allocation5 + $0x2c0] sm:$0xff]
    %v129 = vld [vmem:[#allocation5 + $0x2c8] sm:$0xff]
    %v130 = vld [vmem:[#allocation5 + $0x2d0] sm:$0xff]
    %v131 = vld [vmem:[#allocation5 + $0x2d8] sm:$0xff]
    %v132 = vld [vmem:[#allocation5 + $0x2e0] sm:$0xff]
    %v133 = vld [vmem:[#allocation5 + $0x2e8] sm:$0xff]
    %v134 = vld [vmem:[#allocation5 + $0x2f0] sm:$0xff]
    %v135 = vld [vmem:[#allocation5 + $0x2f8] sm:$0xff]
    %v136 = vld [vmem:[#allocation5 + $0x300] sm:$0xff]
    %v137 = vld [vmem:[#allocation5 + $0x308] sm:$0xff]
    %v138 = vld [vmem:[#allocation5 + $0x310] sm:$0xff]
    %v139 = vld [vmem:[#allocation5 + $0x318] sm:$0xff]
    %v140 = vld [vmem:[#allocation5 + $0x320] sm:$0xff]
    %v141 = vld [vmem:[#allocation5 + $0x328] sm:$0xff]
    %v142 = vld [vmem:[#allocation5 + $0x330] sm:$0xff]
    %v143 = vld [vmem:[#allocation5 + $0x338] sm:$0xff]
    %v144 = vld [vmem:[#allocation5 + $0x340] sm:$0xff]
    %v145 = vld [vmem:[#allocation5 + $0x348] sm:$0xff]
    %v146 = vld [vmem:[#allocation5 + $0x350] sm:$0xff]
    %v147 = vld [vmem:[#allocation5 + $0x358] sm:$0xff]
    %v148 = vld [vmem:[#allocation5 + $0x360] sm:$0xff]
    %v149 = vld [vmem:[#allocation5 + $0x368] sm:$0xff]
    %v150 = vld [vmem:[#allocation5 + $0x370] sm:$0xff]
    %v151 = vld [vmem:[#allocation5 + $0x378] sm:$0xff]
    %v152 = vld [vmem:[#allocation5 + $0x380] sm:$0xff]
    %v153 = vld [vmem:[#allocation5 + $0x388] sm:$0xff]
    %v154 = vld [vmem:[#allocation5 + $0x390] sm:$0xff]
    %v155 = vld [vmem:[#allocation5 + $0x398] sm:$0xff]
    %v156 = vld [vmem:[#allocation5 + $0x3a0] sm:$0xff]
    %v157 = vld [vmem:[#allocation5 + $0x3a8] sm:$0xff]
    %v158 = vld [vmem:[#allocation5 + $0x3b0] sm:$0xff]
    %v159 = vld [vmem:[#allocation5 + $0x3b8] sm:$0xff]
    %v160 = vld [vmem:[#allocation5 + $0x3c0] sm:$0xff]
    %v161 = vld [vmem:[#allocation5 + $0x3c8] sm:$0xff]
    %v162 = vld [vmem:[#allocation5 + $0x3d0] sm:$0xff]
    %v163 = vld [vmem:[#allocation5 + $0x3d8] sm:$0xff]
    %v164 = vld [vmem:[#allocation5 + $0x3e0] sm:$0xff]
    %v165 = vld [vmem:[#allocation5 + $0x3e8] sm:$0xff]
    %v166 = vld [vmem:[#allocation5 + $0x3f0] sm:$0xff]
    %v167 = vld [vmem:[#allocation5 + $0x3f8] sm:$0xff]
    %v170 = vcombine.high %v38, %v38
    %v172 = vunpack.c.l.s4 1983009808
    %v173 = vunpack.c.0.s8 %v172
    %v174 = vlaneseq
    %v175 = vshrl.u32 %v174, 7
    %v176 = vsub.s32 %v173, %v175
    %v177 = vrot.slane %v38, %v176
    %v179 = vunpack.c.l.s4 1983009808
    %v180 = vunpack.c.0.s8 %v179
    %v181 = vlaneseq
    %v182 = vshrl.u32 %v181, 7
    %v183 = vsub.s32 %v180, %v182
    %v184 = vrot.slane %v170, %v183
    %v185 = vcombine.high %v177, %v177
    %v186 = vcombine.high %v184, %v184
    %v187 = vcombine.high %v39, %v39
    %v189 = vunpack.c.l.s4 1983009808
    %v190 = vunpack.c.0.s8 %v189
    %v191 = vlaneseq
    %v192 = vshrl.u32 %v191, 7
    %v193 = vsub.s32 %v190, %v192
    %v194 = vrot.slane %v39, %v193
    %v196 = vunpack.c.l.s4 1983009808
    %v197 = vunpack.c.0.s8 %v196
    %v198 = vlaneseq
    %v199 = vshrl.u32 %v198, 7
    %v200 = vsub.s32 %v197, %v199
    %v201 = vrot.slane %v187, %v200
    %v202 = vcombine.high %v194, %v194
    %v203 = vcombine.high %v201, %v201
    %212 = vmatprep.subr.mxu0 0.0
    %213 = vmatpush1.msra.mxu0 %v40
    %214 = vmatprep.subr.mxu0 0.0
    %215 = vmatpush1.msra.mxu0 %v41
    %216 = vmatprep.subr.mxu0 0.0
    %217 = vmatpush1.msra.mxu0 %v42
    %218 = vmatprep.subr.mxu0 0.0
    %219 = vmatpush1.msra.mxu0 %v43
    %220 = vmatprep.subr.mxu0 0.0
    %221 = vmatpush1.msra.mxu0 %v44
    %222 = vmatprep.subr.mxu0 0.0
    %223 = vmatpush1.msra.mxu0 %v45
    %224 = vmatprep.subr.mxu0 0.0
    %225 = vmatpush1.msra.mxu0 %v46
    %226 = vmatprep.subr.mxu0 0.0
    %227 = vmatpush1.msra.mxu0 %v47
    %228 = vmatprep.subr.mxu0 0.0
    %229 = vmatpush1.msra.mxu0 %v48
    %230 = vmatprep.subr.mxu0 0.0
    %231 = vmatpush1.msra.mxu0 %v49
    %232 = vmatprep.subr.mxu0 0.0
    %233 = vmatpush1.msra.mxu0 %v50
    %234 = vmatprep.subr.mxu0 0.0
    %235 = vmatpush1.msra.mxu0 %v51
    %236 = vmatprep.subr.mxu0 0.0
    %237 = vmatpush1.msra.mxu0 %v52
    %238 = vmatprep.subr.mxu0 0.0
    %239 = vmatpush1.msra.mxu0 %v53
    %240 = vmatprep.subr.mxu0 0.0
    %241 = vmatpush1.msra.mxu0 %v54
    %242 = vmatprep.subr.mxu0 0.0
    %243 = vmatpush1.msra.mxu0 %v55
    %244 = vmatprep.subr.mxu0 0.0
    %245 = vmatpush1.msra.mxu0 %v56
    %246 = vmatprep.subr.mxu0 0.0
    %247 = vmatpush1.msra.mxu0 %v57
    %248 = vmatprep.subr.mxu0 0.0
    %249 = vmatpush1.msra.mxu0 %v58
    %250 = vmatprep.subr.mxu0 0.0
    %251 = vmatpush1.msra.mxu0 %v59
    %252 = vmatprep.subr.mxu0 0.0
    %253 = vmatpush1.msra.mxu0 %v60
    %254 = vmatprep.subr.mxu0 0.0
    %255 = vmatpush1.msra.mxu0 %v61
    %256 = vmatprep.subr.mxu0 0.0
    %257 = vmatpush1.msra.mxu0 %v62
    %258 = vmatprep.subr.mxu0 0.0
    %259 = vmatpush1.msra.mxu0 %v63
    %260 = vmatprep.subr.mxu0 0.0
    %261 = vmatpush1.msra.mxu0 %v64
    %262 = vmatprep.subr.mxu0 0.0
    %263 = vmatpush1.msra.mxu0 %v65
    %264 = vmatprep.subr.mxu0 0.0
    %265 = vmatpush1.msra.mxu0 %v66
    %266 = vmatprep.subr.mxu0 0.0
    %267 = vmatpush1.msra.mxu0 %v67
    %268 = vmatprep.subr.mxu0 0.0
    %269 = vmatpush1.msra.mxu0 %v68
    %270 = vmatprep.subr.mxu0 0.0
    %271 = vmatpush1.msra.mxu0 %v69
    %272 = vmatprep.subr.mxu0 0.0
    %273 = vmatpush1.msra.mxu0 %v70
    %274 = vmatprep.subr.mxu0 0.0
    %275 = vmatpush1.msra.mxu0 %v71
    %276 = vmatprep.mubr.f32.mxu0 %v185
    %277 = vmatmul.mubr.f32.gmra.mrb[0].mxu0 %v177
    %v278 = vpop.f32.mrb[0].mxu0
    %v279 = vadd.f32 0.0, %v278
    %v280 = vpop.f32.mrb[0].mxu0
    %281 = vdwg.mxu0
    %282 = vmatprep.subr.mxu0 0.0
    %283 = vmatpush1.msra.mxu0 %v72
    %284 = vmatprep.subr.mxu0 0.0
    %285 = vmatpush1.msra.mxu0 %v73
    %286 = vmatprep.subr.mxu0 0.0
    %287 = vmatpush1.msra.mxu0 %v74
    %288 = vmatprep.subr.mxu0 0.0
    %289 = vmatpush1.msra.mxu0 %v75
    %290 = vmatprep.subr.mxu0 0.0
    %291 = vmatpush1.msra.mxu0 %v76
    %292 = vmatprep.subr.mxu0 0.0
    %293 = vmatpush1.msra.mxu0 %v77
    %294 = vmatprep.subr.mxu0 0.0
    %295 = vmatpush1.msra.mxu0 %v78
    %296 = vmatprep.subr.mxu0 0.0
    %297 = vmatpush1.msra.mxu0 %v79
    %298 = vmatprep.subr.mxu0 0.0
    %299 = vmatpush1.msra.mxu0 %v80
    %300 = vmatprep.subr.mxu0 0.0
    %301 = vmatpush1.msra.mxu0 %v81
    %302 = vmatprep.subr.mxu0 0.0
    %303 = vmatpush1.msra.mxu0 %v82
    %304 = vmatprep.subr.mxu0 0.0
    %305 = vmatpush1.msra.mxu0 %v83
    %306 = vmatprep.subr.mxu0 0.0
    %307 = vmatpush1.msra.mxu0 %v84
    %308 = vmatprep.subr.mxu0 0.0
    %309 = vmatpush1.msra.mxu0 %v85
    %310 = vmatprep.subr.mxu0 0.0
    %311 = vmatpush1.msra.mxu0 %v86
    %312 = vmatprep.subr.mxu0 0.0
    %313 = vmatpush1.msra.mxu0 %v87
    %314 = vmatprep.subr.mxu0 0.0
    %315 = vmatpush1.msra.mxu0 %v88
    %316 = vmatprep.subr.mxu0 0.0
    %317 = vmatpush1.msra.mxu0 %v89
    %318 = vmatprep.subr.mxu0 0.0
    %319 = vmatpush1.msra.mxu0 %v90
    %320 = vmatprep.subr.mxu0 0.0
    %321 = vmatpush1.msra.mxu0 %v91
    %322 = vmatprep.subr.mxu0 0.0
    %323 = vmatpush1.msra.mxu0 %v92
    %324 = vmatprep.subr.mxu0 0.0
    %325 = vmatpush1.msra.mxu0 %v93
    %326 = vmatprep.subr.mxu0 0.0
    %327 = vmatpush1.msra.mxu0 %v94
    %328 = vmatprep.subr.mxu0 0.0
    %329 = vmatpush1.msra.mxu0 %v95
    %330 = vmatprep.subr.mxu0 0.0
    %331 = vmatpush1.msra.mxu0 %v96
    %332 = vmatprep.subr.mxu0 0.0
    %333 = vmatpush1.msra.mxu0 %v97
    %334 = vmatprep.subr.mxu0 0.0
    %335 = vmatpush1.msra.mxu0 %v98
    %336 = vmatprep.subr.mxu0 0.0
    %337 = vmatpush1.msra.mxu0 %v99
    %338 = vmatprep.subr.mxu0 0.0
    %339 = vmatpush1.msra.mxu0 %v100
    %340 = vmatprep.subr.mxu0 0.0
    %341 = vmatpush1.msra.mxu0 %v101
    %342 = vmatprep.subr.mxu0 0.0
    %343 = vmatpush1.msra.mxu0 %v102
    %344 = vmatprep.subr.mxu0 0.0
    %345 = vmatpush1.msra.mxu0 %v103
    %346 = vmatprep.mubr.f32.mxu0 %v186
    %347 = vmatmul.mubr.f32.gmra.mrb[0].mxu0 %v184
    %v348 = vpop.f32.mrb[0].mxu0
    %v349 = vadd.f32 %v279, %v348
    %v350 = vpop.f32.mrb[0].mxu0
    %351 = vdwg.mxu0
    %352 = vmatprep.subr.mxu0 0.0
    %353 = vmatpush1.msra.mxu0 %v104
    %354 = vmatprep.subr.mxu0 0.0
    %355 = vmatpush1.msra.mxu0 %v105
    %356 = vmatprep.subr.mxu0 0.0
    %357 = vmatpush1.msra.mxu0 %v106
    %358 = vmatprep.subr.mxu0 0.0
    %359 = vmatpush1.msra.mxu0 %v107
    %360 = vmatprep.subr.mxu0 0.0
    %361 = vmatpush1.msra.mxu0 %v108
    %362 = vmatprep.subr.mxu0 0.0
    %363 = vmatpush1.msra.mxu0 %v109
    %364 = vmatprep.subr.mxu0 0.0
    %365 = vmatpush1.msra.mxu0 %v110
    %366 = vmatprep.subr.mxu0 0.0
    %367 = vmatpush1.msra.mxu0 %v111
    %368 = vmatprep.subr.mxu0 0.0
    %369 = vmatpush1.msra.mxu0 %v112
    %370 = vmatprep.subr.mxu0 0.0
    %371 = vmatpush1.msra.mxu0 %v113
    %372 = vmatprep.subr.mxu0 0.0
    %373 = vmatpush1.msra.mxu0 %v114
    %374 = vmatprep.subr.mxu0 0.0
    %375 = vmatpush1.msra.mxu0 %v115
    %376 = vmatprep.subr.mxu0 0.0
    %377 = vmatpush1.msra.mxu0 %v116
    %378 = vmatprep.subr.mxu0 0.0
    %379 = vmatpush1.msra.mxu0 %v117
    %380 = vmatprep.subr.mxu0 0.0
    %381 = vmatpush1.msra.mxu0 %v118
    %382 = vmatprep.subr.mxu0 0.0
    %383 = vmatpush1.msra.mxu0 %v119
    %384 = vmatprep.subr.mxu0 0.0
    %385 = vmatpush1.msra.mxu0 %v120
    %386 = vmatprep.subr.mxu0 0.0
    %387 = vmatpush1.msra.mxu0 %v121
    %388 = vmatprep.subr.mxu0 0.0
    %389 = vmatpush1.msra.mxu0 %v122
    %390 = vmatprep.subr.mxu0 0.0
    %391 = vmatpush1.msra.mxu0 %v123
    %392 = vmatprep.subr.mxu0 0.0
    %393 = vmatpush1.msra.mxu0 %v124
    %394 = vmatprep.subr.mxu0 0.0
    %395 = vmatpush1.msra.mxu0 %v125
    %396 = vmatprep.subr.mxu0 0.0
    %397 = vmatpush1.msra.mxu0 %v126
    %398 = vmatprep.subr.mxu0 0.0
    %399 = vmatpush1.msra.mxu0 %v127
    %400 = vmatprep.subr.mxu0 0.0
    %401 = vmatpush1.msra.mxu0 %v128
    %402 = vmatprep.subr.mxu0 0.0
    %403 = vmatpush1.msra.mxu0 %v129
    %404 = vmatprep.subr.mxu0 0.0
    %405 = vmatpush1.msra.mxu0 %v130
    %406 = vmatprep.subr.mxu0 0.0
    %407 = vmatpush1.msra.mxu0 %v131
    %408 = vmatprep.subr.mxu0 0.0
    %409 = vmatpush1.msra.mxu0 %v132
    %410 = vmatprep.subr.mxu0 0.0
    %411 = vmatpush1.msra.mxu0 %v133
    %412 = vmatprep.subr.mxu0 0.0
    %413 = vmatpush1.msra.mxu0 %v134
    %414 = vmatprep.subr.mxu0 0.0
    %415 = vmatpush1.msra.mxu0 %v135
    %416 = vmatprep.mubr.f32.mxu0 %v202
    %417 = vmatmul.mubr.f32.gmra.mrb[0].mxu0 %v194
    %v418 = vpop.f32.mrb[0].mxu0
    %v419 = vadd.f32 %v349, %v418
    %v420 = vpop.f32.mrb[0].mxu0
    %421 = vdwg.mxu0
    %422 = vmatprep.subr.mxu0 0.0
    %423 = vmatpush1.msra.mxu0 %v136
    %424 = vmatprep.subr.mxu0 0.0
    %425 = vmatpush1.msra.mxu0 %v137
    %426 = vmatprep.subr.mxu0 0.0
    %427 = vmatpush1.msra.mxu0 %v138
    %428 = vmatprep.subr.mxu0 0.0
    %429 = vmatpush1.msra.mxu0 %v139
    %430 = vmatprep.subr.mxu0 0.0
    %431 = vmatpush1.msra.mxu0 %v140
    %432 = vmatprep.subr.mxu0 0.0
    %433 = vmatpush1.msra.mxu0 %v141
    %434 = vmatprep.subr.mxu0 0.0
    %435 = vmatpush1.msra.mxu0 %v142
    %436 = vmatprep.subr.mxu0 0.0
    %437 = vmatpush1.msra.mxu0 %v143
    %438 = vmatprep.subr.mxu0 0.0
    %439 = vmatpush1.msra.mxu0 %v144
    %440 = vmatprep.subr.mxu0 0.0
    %441 = vmatpush1.msra.mxu0 %v145
    %442 = vmatprep.subr.mxu0 0.0
    %443 = vmatpush1.msra.mxu0 %v146
    %444 = vmatprep.subr.mxu0 0.0
    %445 = vmatpush1.msra.mxu0 %v147
    %446 = vmatprep.subr.mxu0 0.0
    %447 = vmatpush1.msra.mxu0 %v148
    %448 = vmatprep.subr.mxu0 0.0
    %449 = vmatpush1.msra.mxu0 %v149
    %450 = vmatprep.subr.mxu0 0.0
    %451 = vmatpush1.msra.mxu0 %v150
    %452 = vmatprep.subr.mxu0 0.0
    %453 = vmatpush1.msra.mxu0 %v151
    %454 = vmatprep.subr.mxu0 0.0
    %455 = vmatpush1.msra.mxu0 %v152
    %456 = vmatprep.subr.mxu0 0.0
    %457 = vmatpush1.msra.mxu0 %v153
    %458 = vmatprep.subr.mxu0 0.0
    %459 = vmatpush1.msra.mxu0 %v154
    %460 = vmatprep.subr.mxu0 0.0
    %461 = vmatpush1.msra.mxu0 %v155
    %462 = vmatprep.subr.mxu0 0.0
    %463 = vmatpush1.msra.mxu0 %v156
    %464 = vmatprep.subr.mxu0 0.0
    %465 = vmatpush1.msra.mxu0 %v157
    %466 = vmatprep.subr.mxu0 0.0
    %467 = vmatpush1.msra.mxu0 %v158
    %468 = vmatprep.subr.mxu0 0.0
    %469 = vmatpush1.msra.mxu0 %v159
    %470 = vmatprep.subr.mxu0 0.0
    %471 = vmatpush1.msra.mxu0 %v160
    %472 = vmatprep.subr.mxu0 0.0
    %473 = vmatpush1.msra.mxu0 %v161
    %474 = vmatprep.subr.mxu0 0.0
    %475 = vmatpush1.msra.mxu0 %v162
    %476 = vmatprep.subr.mxu0 0.0
    %477 = vmatpush1.msra.mxu0 %v163
    %478 = vmatprep.subr.mxu0 0.0
    %479 = vmatpush1.msra.mxu0 %v164
    %480 = vmatprep.subr.mxu0 0.0
    %481 = vmatpush1.msra.mxu0 %v165
    %482 = vmatprep.subr.mxu0 0.0
    %483 = vmatpush1.msra.mxu0 %v166
    %484 = vmatprep.subr.mxu0 0.0
    %485 = vmatpush1.msra.mxu0 %v167
    %486 = vmatprep.mubr.f32.mxu0 %v203
    %487 = vmatmul.mubr.f32.gmra.mrb[0].mxu0 %v201
    %v488 = vpop.f32.mrb[0].mxu0
    %v489 = vadd.f32 %v419, %v488
    %v490 = vpop.f32.mrb[0].mxu0
    %491 = vdwg.mxu0
    %492 = vst [vmem:[#allocation7] sm:$0x3] %v489
    // Predicated region
    $region18: #{tpu_custom_call.1} parent=1 // pred_check
      _
    $region19: #{tpu_custom_call.1} parent=1 // pred_check_branch
      %494 = sbr.rel (0) target = $region21
    $region20: #{tpu_custom_call.1} parent=1 // pred_region
      %s496 = ssub.s32 32, 32
      %497 = vsyncadd [#allocation4], %s496
      %s499 = sshll.u32 [#allocation7], 4
      %s500 = int_to_ptr.vmem [resolvable:$true] %s499
      %502 = dma.vmem_to_hbm [thread:$0]  %s500, 32, %s2, [#allocation4]
    $region21: #{tpu_custom_call.1} parent=1 // pred_fallthru
      _
    // Predicated region
    $region22: #{tpu_custom_call.1} parent=1 // pred_check
      _
    $region23: #{tpu_custom_call.1} parent=1 // pred_check_branch
      %504 = sbr.rel (0) target = $region25
    $region24: #{tpu_custom_call.1} parent=1 // pred_region
      %505 = dma.done [#allocation4], 32
    $region25: #{tpu_custom_call.1} parent=1 // pred_fallthru
      _
    %506 = vsyncpa [#allocation3], 1
    %507 = vsyncpa [#allocation6], 1
    %508 = vsyncpa [#allocation4], 1

</llo_original>
